<compile_context>
chip_gen: v7x
topology: tpu7x:2x2x1
jax: 0.10.0
libtpu: 0.0.40
codegen_flags: <defaults>
</compile_context>

<pallas_src>
import numpy as np
import jax
import jax.numpy as jnp
from jax.experimental import pallas as pl
from jax.experimental.pallas import tpu as pltpu


# ----------------------------------------------------------------------------
# Helpers
# ----------------------------------------------------------------------------
def _round_up(x, m):
    return ((x + m - 1) // m) * m


def _cdiv(a, b):
    return -(-a // b)


_VMEM_CAP_CACHE = []


def _physical_vmem_bytes():
    """Physical VMEM per TensorCore; conservative 64 MiB (v7x) fallback."""
    if not _VMEM_CAP_CACHE:
        cap = 0
        try:
            cap = int(getattr(pltpu.get_tpu_info(), "vmem_capacity_bytes", 0))
        except Exception:
            cap = 0
        if cap < 32 * 1024 * 1024:
            cap = 64 * 1024 * 1024
        _VMEM_CAP_CACHE.append(cap)
    return _VMEM_CAP_CACHE[0]


def _periodic_hann(win_len):
    n = np.arange(win_len)
    return (0.5 - 0.5 * np.cos(2.0 * np.pi * n / win_len)).astype(np.float32)


def _build_folded_basis_onesided(n_fft, win):
    """Basis for one-sided input:  frames = [Xr || Xi_kept] @ basis.

    Window, 1/n_fft scale, the conjugate-symmetry weights [1, 2, ..., 2, 1] and the
    -sin sign are all folded in.  The all-zero -sin rows for DC (and Nyquist when
    n_fft is even) are dropped so K == n_fft exactly (lane-aligned reduction dim).
    Returns (basis (K, n_fft) float32, imag_lo, imag_hi) where Xi columns
    [imag_lo:imag_hi] are the ones kept.
    """
    n = n_fft
    f_half = n // 2 + 1
    k = np.arange(n, dtype=np.float64)
    f = np.arange(f_half, dtype=np.float64)
    ang = 2.0 * np.pi * np.outer(f, k) / n                       # (f_half, n)
    w = np.full((f_half, 1), 2.0)
    w[0, 0] = 1.0
    if n % 2 == 0:
        w[-1, 0] = 1.0
    scale = (win.astype(np.float64)[None, :] / n) * w
    cos_rows = np.cos(ang) * scale
    sin_rows = -np.sin(ang) * scale
    imag_lo = 1
    imag_hi = f_half - 1 if n % 2 == 0 else f_half
    basis = np.concatenate([cos_rows, sin_rows[imag_lo:imag_hi]],
                           axis=0).astype(np.float32)
    assert basis.shape[0] == n_fft
    return basis, imag_lo, imag_hi


def _build_full_basis(n_fft, win):
    """Basis for already-two-sided input (F == n_fft): frames = [Xr || Xi] @ basis."""
    n = n_fft
    k = np.arange(n, dtype=np.float64)
    ang = 2.0 * np.pi * np.outer(k, k) / n                       # (n, n)
    scale = win.astype(np.float64)[None, :] / n
    return np.concatenate([np.cos(ang) * scale, -np.sin(ang) * scale],
                          axis=0).astype(np.float32)


# ----------------------------------------------------------------------------
# Pallas kernels
# ----------------------------------------------------------------------------
def _matmul_single_step_kernel(x_ref, b_ref, o_ref):
    # Whole reduction in one step: no accumulator scratch, no RMW pass.
    # TODO(synk): mark the basis BlockSpec pipeline_mode=pl.Buffered(1) once the
    #             single-buffer mode is verified on the target JAX version (its block
    #             index is constant, so the second pipeline buffer is dead weight).
    o_ref[...] = jnp.dot(x_ref[...], b_ref[...],
                         preferred_element_type=jnp.float32).astype(o_ref.dtype)


def _matmul_acc_kernel(x_ref, b_ref, o_ref, acc_ref):
    @pl.when(pl.program_id(2) == 0)
    def _():
        acc_ref[...] = jnp.zeros_like(acc_ref)

    acc_ref[...] += jnp.dot(x_ref[...], b_ref[...],
                            preferred_element_type=jnp.float32)

    @pl.when(pl.program_id(2) == pl.num_programs(2) - 1)
    def _():
        o_ref[...] = acc_ref[...].astype(o_ref.dtype)


# ----------------------------------------------------------------------------
# Tile selection
# ----------------------------------------------------------------------------
def _choose_tiles(M, K, n_fft, elem_bytes):
    """Pick (tm, tn, tk) for frames = xcat @ basis.

    * tm: large row tiles (<=512), balanced split with 128-aligned tiles when M is big
      (no forced 2-way split — megacore parallelism comes from the N axis instead).
    * tn: n_fft, or a power-of-two divisor (>=128, <=1024) when there is only one row
      tile (feeds both v7x TensorCores without duplicating basis HBM reads) or when
      needed to keep the working set within the VMEM target.
    * tk: single K step whenever the whole basis fits the basis budget (the basis is
      then streamed from HBM exactly once and no accumulator RMW is needed); otherwise
      balanced, 128-aligned K tiles so K padding stays < one tile.
    """
    phys = _physical_vmem_bytes()
    vmem_target = min(phys // 2, 64 * 1024 * 1024)       # ~32 MiB on v7x, 64 on v5e/v6e
    basis_budget = (vmem_target * 2) // 5                # single-K-step threshold

    # Row tile.
    M8 = _round_up(M, 8)
    if M8 <= 512:
        tm = M8
    else:
        tm = _round_up(_cdiv(M8, _cdiv(M8, 512)), 128)
    n_m = _cdiv(M8, tm)

    # Output-column tile (always a power-of-two divisor of n_fft, multiple of 128).
    tn = n_fft
    if n_m == 1 and n_fft >= 1024 and n_fft % 256 == 0:
        tn = n_fft // 2
        while tn > 1024 and tn % 256 == 0:
            tn //= 2

    K8 = _round_up(K, 8)

    def pick_tk(tn_):
        if K8 * tn_ * elem_bytes <= basis_budget:
            return K8                                     # single K step
        tk_cap = max(128, ((basis_budget // 2) // (tn_ * elem_bytes)) // 128 * 128)
        n_k = _cdiv(K8, tk_cap)
        return _round_up(_cdiv(K8, n_k), 128)

    tk = pick_tk(tn)

    def vmem_est(tm_, tn_, tk_):
        acc = tm_ * tn_ * 4 if tk_ < K8 else 0
        return (2 * tm_ * tk_ * elem_bytes + 2 * tk_ * tn_ * elem_bytes
                + 2 * tm_ * tn_ * 4 + acc)

    # Shrink until the estimated working set fits the target (v7x: 64 MiB physical).
    while vmem_est(tm, tn, tk) > vmem_target:
        if tm > 256:
            tm = max(256, _round_up(tm // 2, 128))
        elif tn > 128 and tn % 256 == 0:
            tn //= 2
            tk = pick_tk(tn)
        elif tk > 128 and tk % 256 == 0:
            tk //= 2
        else:
            break
    return tm, tn, tk


# ----------------------------------------------------------------------------
# Pallas wrapper: frames = xcat @ basis on the MXU.
# ----------------------------------------------------------------------------
def istft_frames_matmul(xcat, basis, *, n_fft, tiles=None):
    """xcat : (M, K) packed frame rows, f32 or bf16.
    basis: (K, n_fft) or (K_pad, n_fft) pre-scaled DFT basis (same dtype as xcat).
    Returns (M, n_fft) float32 windowed frames.
    """
    M, K = xcat.shape
    Kb, N = basis.shape
    assert N == n_fft and basis.dtype == xcat.dtype
    elem_bytes = jnp.dtype(xcat.dtype).itemsize

    if tiles is None:
        tm, tn, tk = _choose_tiles(M, K, n_fft, elem_bytes)
    else:
        tm, tn, tk = tiles
    assert n_fft % tn == 0

    M_pad = _round_up(M, tm)
    K_pad = _round_up(K, tk)
    if M_pad != M or K_pad != K:
        xcat = jnp.pad(xcat, ((0, M_pad - M), (0, K_pad - K)))
    if Kb != K_pad:
        assert Kb == K
        basis = jnp.pad(basis, ((0, K_pad - Kb), (0, 0)))

    n_m, n_n, n_k = M_pad // tm, n_fft // tn, K_pad // tk

    est = (2 * tm * tk * elem_bytes + 2 * tk * tn * elem_bytes
           + 2 * tm * tn * 4 + (tm * tn * 4 if n_k > 1 else 0))
    cp_kwargs = {}
    if est > 12 * 1024 * 1024:
        cp_kwargs["vmem_limit_bytes"] = int(
            min(est + max(est // 4, 2 * 1024 * 1024),
                (_physical_vmem_bytes() * 3) // 4))

    if n_k == 1:
        grid_spec = pltpu.PrefetchScalarGridSpec(
            num_scalar_prefetch=0,
            grid=(n_m, n_n),
            in_specs=[
                pl.BlockSpec((tm, tk), lambda i, j: (i, 0)),
                pl.BlockSpec((tk, tn), lambda i, j: (0, j)),
            ],
            out_specs=pl.BlockSpec((tm, tn), lambda i, j: (i, j)),
        )
        kernel = _matmul_single_step_kernel
        dims = ("parallel", "parallel")
    else:
        grid_spec = pltpu.PrefetchScalarGridSpec(
            num_scalar_prefetch=0,
            grid=(n_m, n_n, n_k),
            in_specs=[
                pl.BlockSpec((tm, tk), lambda i, j, k: (i, k)),
                pl.BlockSpec((tk, tn), lambda i, j, k: (k, j)),
            ],
            out_specs=pl.BlockSpec((tm, tn), lambda i, j, k: (i, j)),
            scratch_shapes=[pltpu.VMEM((tm, tn), jnp.float32)],
        )
        kernel = _matmul_acc_kernel
        dims = ("parallel", "parallel", "arbitrary")

    out = pl.pallas_call(
        kernel,
        out_shape=jax.ShapeDtypeStruct((M_pad, n_fft), jnp.float32),
        grid_spec=grid_spec,
        compiler_params=pltpu.CompilerParams(dimension_semantics=dims, **cp_kwargs),
    )(xcat, basis)
    return out[:M]


# ----------------------------------------------------------------------------
# Glue (plain JAX / numpy): overlap-add, window-sumsquare, trimming.
# ----------------------------------------------------------------------------
def _overlap_add(frames, hop):
    """frames: (BC, T, n_fft) -> (BC, n_fft + hop*(T-1)) via shifted adds (no scatter)."""
    BC, T, n = frames.shape
    L = n + hop * (T - 1)
    if n % hop == 0:
        r = n // hop
        fr = frames.reshape(BC, T, r, hop)
        out = jnp.zeros((BC, L), jnp.float32)
        for j in range(r):                       # r static shifted adds
            out = out.at[:, j * hop: j * hop + T * hop].add(
                fr[:, :, j, :].reshape(BC, T * hop))
        return out
    # TODO(synk): hop not dividing n_fft falls back to scatter-add (correct, slow on TPU).
    idx = jnp.arange(T)[:, None] * hop + jnp.arange(n)[None, :]
    return jnp.zeros((BC, L), jnp.float32).at[:, idx].add(frames)


class IStftConvPallas:
    """JAX/Pallas equivalent of iStftConv.forward for complex spectrogram inputs."""

    def __init__(self, fft_len=2048, win_len=None, win_hop=None, win_type="hann",
                 pad_center=True, compute_dtype=jnp.float32):
        assert win_type == "hann", "only 'hann' window implemented in-script"
        if not win_len:
            win_len = fft_len
        if not win_hop:
            win_hop = int(win_len // 4)
        # TODO(synk): win_len < fft_len (center-padded window) not implemented.
        assert win_len == fft_len, "win_len must equal fft_len (as required by _inverse_stft)"
        self.fft_len = fft_len
        self.win_len = win_len
        self.win_hop = win_hop
        self.pad_center = pad_center
        self.pad_amount = fft_len // 2
        self.compute_dtype = jnp.dtype(compute_dtype)

        self._win_np = _periodic_hann(win_len)                          # (n_fft,) numpy
        # One-sided (folded) basis: window, 1/n, symmetry weights baked in; K == n_fft.
        basis_np, self._imag_lo, self._imag_hi = _build_folded_basis_onesided(
            fft_len, self._win_np)
        self.basis_onesided = jnp.asarray(basis_np, dtype=self.compute_dtype)
        self._basis_full = None                                         # built lazily
        self._basis_cache = {}                                          # padded variants
        self._norm_cache = {}                                           # per-T win-sumsq

    # -- constants -----------------------------------------------------------
    def _get_full_basis(self):
        if self._basis_full is None:
            self._basis_full = jnp.asarray(
                _build_full_basis(self.fft_len, self._win_np), dtype=self.compute_dtype)
        return self._basis_full

    def _padded_basis(self, one_sided, K_pad):
        """Basis padded to K_pad rows, prepared once per (path, K_pad) and cached."""
        key = (bool(one_sided), int(K_pad))
        if key not in self._basis_cache:
            b = self.basis_onesided if one_sided else self._get_full_basis()
            if K_pad > b.shape[0]:
                b = jnp.concatenate(
                    [b, jnp.zeros((K_pad - b.shape[0], b.shape[1]), b.dtype)], axis=0)
            self._basis_cache[key] = b
        return self._basis_cache[key]

    def _norm_for(self, T):
        """Window-sumsquare normalization factor, precomputed host-side per T."""
        if T not in self._norm_cache:
            n, hop = self.fft_len, self.win_hop
            L = n + hop * (T - 1)
            win_sq = (self._win_np.astype(np.float64)) ** 2
            ws = np.zeros(L, np.float64)
            for t in range(T):
                ws[t * hop: t * hop + n] += win_sq
            norm = np.where(ws > 1e-10, 1.0 / ws, 1.0).astype(np.float32)
            self._norm_cache[T] = jnp.asarray(norm)
        return self._norm_cache[T]

    # -- forward -------------------------------------------------------------
    def _inverse_stft(self, X, length, one_sided, use_pallas=True):
        BC, F, T, _ = X.shape
        n_fft, hop = self.fft_len, self.win_hop

        # One transpose packs the frame rows; the all-zero basis rows (imag DC/Nyquist)
        # and their input columns are dropped on the one-sided path so K == n_fft.
        xt = jnp.transpose(X, (0, 2, 3, 1))                        # (BC, T, 2, F)
        if one_sided:
            assert F == n_fft // 2 + 1
            xcat = jnp.concatenate(
                [xt[:, :, 0, :], xt[:, :, 1, self._imag_lo:self._imag_hi]],
                axis=-1).reshape(BC * T, n_fft)
        else:
            assert F == n_fft, "two-sided input must have F == fft_len"
            xcat = xt.reshape(BC * T, 2 * F)

        M, K = xcat.shape
        elem_bytes = self.compute_dtype.itemsize
        tm, tn, tk = _choose_tiles(M, K, n_fft, elem_bytes)
        K_pad = _round_up(K, tk)
        basis = self._padded_basis(one_sided, K_pad)               # cached, pre-cast

        if use_pallas:
            frames = istft_frames_matmul(xcat.astype(self.compute_dtype), basis,
                                         n_fft=n_fft, tiles=(tm, tn, tk))
        else:  # pure-JAX reference path for validation
            frames = jnp.dot(xcat.astype(jnp.float32),
                             basis[:K].astype(jnp.float32),
                             precision=jax.lax.Precision.HIGHEST)
        frames = frames.reshape(BC, T, n_fft)

        # TODO(synk): overlap-add + window-sumsquare normalization still runs in XLA;
        #             fusing it into a second Pallas kernel is the next HBM-traffic win.
        real = _overlap_add(frames, hop)            # (BC, L)
        real = real * self._norm_for(T)             # window-sumsquare normalization

        if length is None:
            if self.pad_center:
                real = real[:, self.pad_amount:-self.pad_amount]
        elif self.pad_center:
            real = real[:, self.pad_amount:self.pad_amount + length]
        else:
            real = real[:, :length]
        return real

    def __call__(self, x, N, use_pallas=True):
        """x: (B, C, F, T, 2) float complex spectrogram; returns (B*C, N) waveform."""
        # TODO(synk): griffin-lim path (3-D magnitude input) not translated (needs
        #             iterative torch.stft/istft with random phase).
        assert x.ndim == 5 and x.shape[-1] == 2
        B, C, F, T, _ = x.shape
        z = x.reshape(B * C, F, T, 2)
        one_sided = (F == self.fft_len // 2 + 1)
        return self._inverse_stft(z, N, one_sided, use_pallas=use_pallas)


# ----------------------------------------------------------------------------
# Straight (unoptimized) translation of the PyTorch module for validation:
# extend_fbins + full cos/sin basis + window + scatter OLA + win-sumsquare.
# ----------------------------------------------------------------------------
def _reference_unfolded(x, fft_len, hop, pad_center, length):
    B, C, F, T, _ = x.shape
    X = x.reshape(B * C, F, T, 2)
    X_up = jnp.flip(X[:, 1:-1], axis=1)
    X_up = jnp.stack([X_up[..., 0], -X_up[..., 1]], axis=-1)
    Xf = jnp.concatenate([X, X_up], axis=1)                      # (BC, n_fft, T, 2)

    n = fft_len
    k = np.arange(n, dtype=np.float64)
    ang = 2.0 * np.pi * np.outer(k, k) / n
    ct = jnp.asarray(np.cos(ang), jnp.float32)
    st = jnp.asarray(np.sin(ang), jnp.float32)
    win = jnp.asarray(_periodic_hann(n))

    xr = jnp.transpose(Xf[..., 0], (0, 2, 1))                    # (BC, T, n)
    xi = jnp.transpose(Xf[..., 1], (0, 2, 1))
    hp = jax.lax.Precision.HIGHEST
    frames = (jnp.einsum("btf,fk->btk", xr, ct, precision=hp)
              - jnp.einsum("btf,fk->btk", xi, st, precision=hp))
    frames = frames * win[None, None, :] / n

    L = n + hop * (T - 1)
    idx = jnp.arange(T)[:, None] * hop + jnp.arange(n)[None, :]
    real = jnp.zeros((B * C, L), jnp.float32).at[:, idx].add(frames)
    ws = jnp.zeros((L,), jnp.float32).at[idx].add(jnp.broadcast_to(win ** 2, (T, n)))
    real = jnp.where(ws > 1e-10, real / jnp.where(ws > 1e-10, ws, 1.0), real)

    pad = n // 2
    if length is None:
        if pad_center:
            real = real[:, pad:-pad]
    elif pad_center:
        real = real[:, pad:pad + length]
    else:
        real = real[:, :length]
    return real


# ----------------------------------------------------------------------------
if __name__ == "__main__":
    fft_len, hop = 128, 32
    B, C, T, N = 2, 2, 12, 320
    F = fft_len // 2 + 1  # 65 (one-sided spectrum)

    key = jax.random.PRNGKey(0)
    k0, k1, k2 = jax.random.split(key, 3)
    x = jax.random.normal(k0, (B, C, F, T, 2), dtype=jnp.float32)

    module = IStftConvPallas(fft_len=fft_len, win_hop=hop)

    out = jax.block_until_ready(module(x, N, use_pallas=True))
    assert out.shape == (B * C, N), out.shape

    # f32 validation: Pallas kernel vs pure-JAX folded path vs unfolded reference.
    ref_folded = jax.block_until_ready(module(x, N, use_pallas=False))
    np.testing.assert_allclose(np.asarray(out), np.asarray(ref_folded),
                               rtol=5e-4, atol=5e-4)

    ref_unfolded = jax.block_until_ready(_reference_unfolded(x, fft_len, hop, True, N))
    np.testing.assert_allclose(np.asarray(out), np.asarray(ref_unfolded),
                               rtol=5e-4, atol=5e-4)

    # Two-sided (F == fft_len) path: extend the half spectrum and run the full basis.
    z = x.reshape(B * C, F, T, 2)
    up = jnp.flip(z[:, 1:-1], axis=1)
    up = jnp.stack([up[..., 0], -up[..., 1]], axis=-1)
    x_full = jnp.concatenate([z, up], axis=1).reshape(B, C, fft_len, T, 2)
    out_full = jax.block_until_ready(module(x_full, N, use_pallas=True))
    np.testing.assert_allclose(np.asarray(out_full), np.asarray(ref_unfolded),
                               rtol=5e-4, atol=5e-4)

    # bf16-operand / f32-accumulation fast path (recommended on v6e / v7x).
    module_bf16 = IStftConvPallas(fft_len=fft_len, win_hop=hop,
                                  compute_dtype=jnp.bfloat16)
    out_bf16 = jax.block_until_ready(module_bf16(x, N, use_pallas=True))
    assert out_bf16.shape == (B * C, N)
    assert float(jnp.max(jnp.abs(out_bf16 - ref_folded))) < 5e-2

    # Coverage for the multi-K-step accumulator kernel + N-axis split (forced tiny tiles).
    xt = jax.random.normal(k1, (40, 256), dtype=jnp.float32)
    bt = jax.random.normal(k2, (256, 256), dtype=jnp.float32)
    got = jax.block_until_ready(
        istft_frames_matmul(xt, bt, n_fft=256, tiles=(40, 128, 128)))
    want = jnp.dot(xt, bt, precision=jax.lax.Precision.HIGHEST)
    np.testing.assert_allclose(np.asarray(got), np.asarray(want),
                               rtol=5e-4, atol=1e-2)

    print("KERNEL_OK")
</pallas_src>

<mosaic_0001>
module attributes {stable_mosaic.version = 11 : i64} {
  func.func @_matmul_single_step_kernel(%arg0: i32, %arg1: i32, %arg2: memref<48x128xf32, #tpu.memory_space<vmem>>, %arg3: memref<128x128xf32, #tpu.memory_space<vmem>>, %arg4: memref<48x128xf32, #tpu.memory_space<vmem>>) attributes {dimension_semantics = [#tpu.dimension_semantics<parallel>, #tpu.dimension_semantics<parallel>], iteration_bounds = array<i64: 1, 1>, scalar_prefetch = 0 : i64, scratch_operands = 0 : i64, tpu.core_type = #tpu.core_type<tc>, window_params = [{transform_indices = @transform_0, window_bounds = array<i64: 48, 128>}, {transform_indices = @transform_1, window_bounds = array<i64: 128, 128>}, {transform_indices = @transform_2, window_bounds = array<i64: 48, 128>}]} {
    %c0 = arith.constant 0 : index
    %c0_0 = arith.constant 0 : index
    %0 = vector.load %arg2[%c0, %c0_0] : memref<48x128xf32, #tpu.memory_space<vmem>>, vector<48x128xf32>
    %c0_1 = arith.constant 0 : index
    %c0_2 = arith.constant 0 : index
    %1 = vector.load %arg3[%c0_1, %c0_2] : memref<128x128xf32, #tpu.memory_space<vmem>>, vector<128x128xf32>
    %cst = arith.constant dense<0.000000e+00> : vector<48x128xf32>
    %2 = tpu.matmul %0, %1, %cst {dimension_numbers = #tpu.dot_dimension_numbers<[1], [0], [0], [1], [0, 0, 1, 1], [], []>} : vector<48x128xf32>, vector<128x128xf32>, vector<48x128xf32> -> vector<48x128xf32>
    %c0_3 = arith.constant 0 : index
    %c0_4 = arith.constant 0 : index
    %3 = vector.load %arg4[%c0_3, %c0_4] : memref<48x128xf32, #tpu.memory_space<vmem>>, vector<48x128xf32>
    tpu.vector_store %arg4[%c0_3, %c0_4], %2 {strides = array<i32>} : memref<48x128xf32, #tpu.memory_space<vmem>>, vector<48x128xf32>,
    return
  }
  func.func @transform_0(%arg0: i32, %arg1: i32) -> (i32, i32) {
    %c0_i32 = arith.constant 0 : i32
    %c0_i32_0 = arith.constant 0 : i32
    return %arg0, %c0_i32 : i32, i32
  }
  func.func @transform_1(%arg0: i32, %arg1: i32) -> (i32, i32) {
    %c0_i32 = arith.constant 0 : i32
    %c0_i32_0 = arith.constant 0 : i32
    return %c0_i32, %arg1 : i32, i32
  }
  func.func @transform_2(%arg0: i32, %arg1: i32) -> (i32, i32) {
    %c0_i32 = arith.constant 0 : i32
    return %arg0, %arg1 : i32, i32
  }
}

</mosaic_0001>

<llo_original>
// kernel: tpu_custom_call.1
$region0: #{tpu_custom_call.1}
  #allocation0 [shape = 'u32[]', space=smem, size = 0x4, offset = 0x4, fixed_abs, tag = 'smem constant byte address 0x4 - core index']
  #allocation1 [shape = 'u32[144,128]{1,0:T(1,128)}', space=vmem, size = 0x12000, scoped, tag = 'internal scratch']
  %s0 = inlined_call_operand.hbm [shape: f32[48,128], index: 0, kind: input, shape index: {}]
  %s1 = inlined_call_operand.hbm [shape: f32[128,128], index: 1, kind: input, shape index: {}]
  %s2 = inlined_call_operand.hbm [shape: f32[48,128], index: 2, kind: output, shape index: {}]
  %s3 = sld [smem:[#allocation0]]
  $region26: #{tpu_custom_call.1} parent=0
    _
  %s5 = ssub.s32 1, %s3
  %s6 = scalar_select 0, %s5, %s3
  $region1: #{tpu_custom_call.1} parent=0
    #allocation2 [shape = 'u8[24576]{0}', space=vmem, size = 0x6000, scoped, tag = 'input window, operand 0, single buffered']
    #allocation3 [shape = 's32[1]{0}', space=sflag, size = 0x4, scoped, tag = 'scoped memory for tpu_custom_call.1']
    #allocation4 [shape = 's32[1]{0}', space=sflag, size = 0x4, scoped, tag = 'scoped memory for tpu_custom_call.1']
    #allocation5 [shape = 'u8[65536]{0}', space=vmem, size = 0x10000, scoped, tag = 'input window, operand 1, single buffered']
    #allocation6 [shape = 's32[1]{0}', space=sflag, size = 0x4, scoped, tag = 'scoped memory for tpu_custom_call.1']
    #allocation7 [shape = 'u8[24576]{0}', space=vmem, size = 0x6000, scoped, tag = 'output window, operand 0, single buffered']
    %7 = vsyncpa [#allocation3], 0
    %8 = vsyncpa [#allocation6], 0
    %9 = vsyncpa [#allocation4], 0
    // Predicated region
    $region2: #{tpu_custom_call.1} parent=1 // pred_check
      _
    $region3: #{tpu_custom_call.1} parent=1 // pred_check_branch
      %11 = sbr.rel (0) target = $region5
    $region4: #{tpu_custom_call.1} parent=1 // pred_region
      %s13 = ssub.s32 768, 768
      %14 = vsyncadd [#allocation3], %s13
      %s15 = sshll.u32 [#allocation2], 4
      %s16 = int_to_ptr.vmem [resolvable:$true] %s15
      %21 = dma.hbm_to_vmem [thread:$0]  %s0, 768, %s16, [#allocation3], 128, 128, 8
    $region5: #{tpu_custom_call.1} parent=1 // pred_fallthru
      _
    // Predicated region
    $region6: #{tpu_custom_call.1} parent=1 // pred_check
      _
    $region7: #{tpu_custom_call.1} parent=1 // pred_check_branch
      %23 = sbr.rel (0) target = $region9
    $region8: #{tpu_custom_call.1} parent=1 // pred_region
      %s25 = ssub.s32 2048, 2048
      %26 = vsyncadd [#allocation6], %s25
      %s27 = sshll.u32 [#allocation5], 4
      %s28 = int_to_ptr.vmem [resolvable:$true] %s27
      %33 = dma.hbm_to_vmem [thread:$0]  %s1, 2048, %s28, [#allocation6], 128, 128, 8
    $region9: #{tpu_custom_call.1} parent=1 // pred_fallthru
      _
    // Predicated region
    $region10: #{tpu_custom_call.1} parent=1 // pred_check
      _
    $region11: #{tpu_custom_call.1} parent=1 // pred_check_branch
      %35 = sbr.rel (0) target = $region13
    $region12: #{tpu_custom_call.1} parent=1 // pred_region
      %36 = dma.done [#allocation3], 768
    $region13: #{tpu_custom_call.1} parent=1 // pred_fallthru
      _
    // Predicated region
    $region14: #{tpu_custom_call.1} parent=1 // pred_check
      _
    $region15: #{tpu_custom_call.1} parent=1 // pred_check_branch
      %38 = sbr.rel (0) target = $region17
    $region16: #{tpu_custom_call.1} parent=1 // pred_region
      %39 = dma.done [#allocation6], 2048
    $region17: #{tpu_custom_call.1} parent=1 // pred_fallthru
      _
    %v40 = vld [vmem:[#allocation2] sm:$0xff]
    %v41 = vld [vmem:[#allocation2 + $0x8] sm:$0xff]
    %v42 = vld [vmem:[#allocation2 + $0x10] sm:$0xff]
    %v43 = vld [vmem:[#allocation2 + $0x18] sm:$0xff]
    %v44 = vld [vmem:[#allocation2 + $0x20] sm:$0xff]
    %v45 = vld [vmem:[#allocation2 + $0x28] sm:$0xff]
    %v46 = vld [vmem:[#allocation5] sm:$0xff]
    %v47 = vld [vmem:[#allocation5 + $0x8] sm:$0xff]
    %v48 = vld [vmem:[#allocation5 + $0x10] sm:$0xff]
    %v49 = vld [vmem:[#allocation5 + $0x18] sm:$0xff]
    %v50 = vld [vmem:[#allocation5 + $0x20] sm:$0xff]
    %v51 = vld [vmem:[#allocation5 + $0x28] sm:$0xff]
    %v52 = vld [vmem:[#allocation5 + $0x30] sm:$0xff]
    %v53 = vld [vmem:[#allocation5 + $0x38] sm:$0xff]
    %v54 = vld [vmem:[#allocation5 + $0x40] sm:$0xff]
    %v55 = vld [vmem:[#allocation5 + $0x48] sm:$0xff]
    %v56 = vld [vmem:[#allocation5 + $0x50] sm:$0xff]
    %v57 = vld [vmem:[#allocation5 + $0x58] sm:$0xff]
    %v58 = vld [vmem:[#allocation5 + $0x60] sm:$0xff]
    %v59 = vld [vmem:[#allocation5 + $0x68] sm:$0xff]
    %v60 = vld [vmem:[#allocation5 + $0x70] sm:$0xff]
    %v61 = vld [vmem:[#allocation5 + $0x78] sm:$0xff]
    %62 = vmatprep.subr.mxu0 0.0
    %63 = vmatpush1.msra.mxu0 %v46
    %64 = vmatprep.subr.mxu0 0.0
    %65 = vmatpush1.msra.mxu0 %v47
    %66 = vmatprep.subr.mxu0 0.0
    %67 = vmatpush1.msra.mxu0 %v48
    %68 = vmatprep.subr.mxu0 0.0
    %69 = vmatpush1.msra.mxu0 %v49
    %70 = vmatprep.subr.mxu0 0.0
    %71 = vmatpush1.msra.mxu0 %v50
    %72 = vmatprep.subr.mxu0 0.0
    %73 = vmatpush1.msra.mxu0 %v51
    %74 = vmatprep.subr.mxu0 0.0
    %75 = vmatpush1.msra.mxu0 %v52
    %76 = vmatprep.subr.mxu0 0.0
    %77 = vmatpush1.msra.mxu0 %v53
    %78 = vmatprep.subr.mxu0 0.0
    %79 = vmatpush1.msra.mxu0 %v54
    %80 = vmatprep.subr.mxu0 0.0
    %81 = vmatpush1.msra.mxu0 %v55
    %82 = vmatprep.subr.mxu0 0.0
    %83 = vmatpush1.msra.mxu0 %v56
    %84 = vmatprep.subr.mxu0 0.0
    %85 = vmatpush1.msra.mxu0 %v57
    %86 = vmatprep.subr.mxu0 0.0
    %87 = vmatpush1.msra.mxu0 %v58
    %88 = vmatprep.subr.mxu0 0.0
    %89 = vmatpush1.msra.mxu0 %v59
    %90 = vmatprep.subr.mxu0 0.0
    %91 = vmatpush1.msra.mxu0 %v60
    %92 = vmatprep.subr.mxu0 0.0
    %93 = vmatpush1.msra.mxu0 %v61
    %94 = vmatprep.subr.mxu0 0.0
    %95 = vmatpush1.msra.mxu0 0.0
    %96 = vmatprep.subr.mxu0 0.0
    %97 = vmatpush1.msra.mxu0 0.0
    %98 = vmatprep.subr.mxu0 0.0
    %99 = vmatpush1.msra.mxu0 0.0
    %100 = vmatprep.subr.mxu0 0.0
    %101 = vmatpush1.msra.mxu0 0.0
    %102 = vmatprep.subr.mxu0 0.0
    %103 = vmatpush1.msra.mxu0 0.0
    %104 = vmatprep.subr.mxu0 0.0
    %105 = vmatpush1.msra.mxu0 0.0
    %106 = vmatprep.subr.mxu0 0.0
    %107 = vmatpush1.msra.mxu0 0.0
    %108 = vmatprep.subr.mxu0 0.0
    %109 = vmatpush1.msra.mxu0 0.0
    %110 = vmatprep.subr.mxu0 0.0
    %111 = vmatpush1.msra.mxu0 0.0
    %112 = vmatprep.subr.mxu0 0.0
    %113 = vmatpush1.msra.mxu0 0.0
    %114 = vmatprep.subr.mxu0 0.0
    %115 = vmatpush1.msra.mxu0 0.0
    %116 = vmatprep.subr.mxu0 0.0
    %117 = vmatpush1.msra.mxu0 0.0
    %118 = vmatprep.subr.mxu0 0.0
    %119 = vmatpush1.msra.mxu0 0.0
    %120 = vmatprep.subr.mxu0 0.0
    %121 = vmatpush1.msra.mxu0 0.0
    %122 = vmatprep.subr.mxu0 0.0
    %123 = vmatpush1.msra.mxu0 0.0
    %124 = vmatprep.subr.mxu0 0.0
    %125 = vmatpush1.msra.mxu0 0.0
    %126 = vmatprep.mubr.f32.mxu0 0.0
    %127 = vmatmul.mubr.f32.gmra.mrb[0].mxu0 %v40
    %v128 = vpop.f32.mrb[0].mxu0
    %v129 = vadd.f32 0.0, %v128
    %v130 = vpop.f32.mrb[0].mxu0
    %131 = vmatprep.mubr.f32.mxu0 0.0
    %132 = vmatmul.mubr.f32.gmra.mrb[0].mxu0 %v41
    %v133 = vpop.f32.mrb[0].mxu0
    %v134 = vadd.f32 0.0, %v133
    %v135 = vpop.f32.mrb[0].mxu0
    %136 = vmatprep.mubr.f32.mxu0 0.0
    %137 = vmatmul.mubr.f32.gmra.mrb[0].mxu0 %v42
    %v138 = vpop.f32.mrb[0].mxu0
    %v139 = vadd.f32 0.0, %v138
    %v140 = vpop.f32.mrb[0].mxu0
    %141 = vmatprep.mubr.f32.mxu0 0.0
    %142 = vmatmul.mubr.f32.gmra.mrb[0].mxu0 %v43
    %v143 = vpop.f32.mrb[0].mxu0
    %v144 = vadd.f32 0.0, %v143
    %v145 = vpop.f32.mrb[0].mxu0
    %146 = vmatprep.mubr.f32.mxu0 0.0
    %147 = vmatmul.mubr.f32.gmra.mrb[0].mxu0 %v44
    %v148 = vpop.f32.mrb[0].mxu0
    %v149 = vadd.f32 0.0, %v148
    %v150 = vpop.f32.mrb[0].mxu0
    %151 = vmatprep.mubr.f32.mxu0 0.0
    %152 = vmatmul.mubr.f32.gmra.mrb[0].mxu0 %v45
    %v153 = vpop.f32.mrb[0].mxu0
    %v154 = vadd.f32 0.0, %v153
    %v155 = vpop.f32.mrb[0].mxu0
    %156 = vdwg.mxu0
    %157 = vst [vmem:[#allocation7] sm:$0xff] %v129
    %158 = vst [vmem:[#allocation7 + $0x8] sm:$0xff] %v134
    %159 = vst [vmem:[#allocation7 + $0x10] sm:$0xff] %v139
    %160 = vst [vmem:[#allocation7 + $0x18] sm:$0xff] %v144
    %161 = vst [vmem:[#allocation7 + $0x20] sm:$0xff] %v149
    %162 = vst [vmem:[#allocation7 + $0x28] sm:$0xff] %v154
    // Predicated region
    $region18: #{tpu_custom_call.1} parent=1 // pred_check
      _
    $region19: #{tpu_custom_call.1} parent=1 // pred_check_branch
      %164 = sbr.rel (0) target = $region21
    $region20: #{tpu_custom_call.1} parent=1 // pred_region
      %s166 = ssub.s32 768, 768
      %167 = vsyncadd [#allocation4], %s166
      %s168 = sshll.u32 [#allocation7], 4
      %s169 = int_to_ptr.vmem [resolvable:$true] %s168
      %174 = dma.vmem_to_hbm [thread:$0]  %s169, 768, %s2, [#allocation4], 128, 128, 8
    $region21: #{tpu_custom_call.1} parent=1 // pred_fallthru
      _
    // Predicated region
    $region22: #{tpu_custom_call.1} parent=1 // pred_check
      _
    $region23: #{tpu_custom_call.1} parent=1 // pred_check_branch
      %176 = sbr.rel (0) target = $region25
    $region24: #{tpu_custom_call.1} parent=1 // pred_region
      %177 = dma.done [#allocation4], 768
    $region25: #{tpu_custom_call.1} parent=1 // pred_fallthru
      _
    %178 = vsyncpa [#allocation3], 1
    %179 = vsyncpa [#allocation6], 1
    %180 = vsyncpa [#allocation4], 1

</llo_original>
